<compile_context>
chip_gen: v7x
topology: tpu7x:2x2x1
jax: 0.10.0
libtpu: 0.0.40
codegen_flags: <defaults>
</compile_context>

<pallas_src>
import jax
import jax.numpy as jnp
from jax import lax
from jax.experimental import pallas as pl
from jax.experimental.pallas import tpu as pltpu

HIDDEN = 128
TILE = 512             # row / k tile for the tiled (large-board) path
FUSE_MAX_NODES = 512   # boards up to this many nodes use the fused kernel


def _round_up(x, m):
    return ((x + m - 1) // m) * m


# ----------------------------------------------------------------------------
# Shared epilogue: fused value (tanh, lane 0) + policy (softmax, lanes 1..P)
# ----------------------------------------------------------------------------
def _heads_epilogue(logits, num_actions):
    gp, hw = logits.shape
    lane = lax.broadcasted_iota(jnp.int32, (gp, hw), 1)
    is_value = lane == 0
    is_policy = (lane >= 1) & (lane <= num_actions)
    masked = jnp.where(is_policy, logits, -1e30)
    m = jnp.max(masked, axis=-1, keepdims=True)
    e = jnp.where(is_policy, jnp.exp(masked - m), 0.0)
    denom = jnp.sum(e, axis=-1, keepdims=True)
    p = e / denom                      # exact normalisation (cheap: (g_pad,1))
    return jnp.where(is_value, jnp.tanh(logits), p)


# ----------------------------------------------------------------------------
# Fused kernel (small boards): whole forward in one pallas_call
# ----------------------------------------------------------------------------
def _make_fused_kernel(num_actions):
    def kernel(a_ref, xw1_ref, b1_ref, w2_ref, b2_ref,
               pool_ref, wh_ref, bh_ref, out_ref):
        a = a_ref[...]
        # Layer 1: H1 = ReLU(A @ (X W1) + b1)   (X W1 precomputed in XLA)
        h1 = jnp.maximum(
            jnp.dot(a, xw1_ref[...], preferred_element_type=jnp.float32)
            + b1_ref[...], 0.0).astype(jnp.bfloat16)
        # Layer 2 (reassociated): H2 = ReLU((A @ H1) @ W2 + b2)
        ah1 = jnp.dot(a, h1, preferred_element_type=jnp.float32
                      ).astype(jnp.bfloat16)
        h2 = jnp.maximum(
            jnp.dot(ah1, w2_ref[...], preferred_element_type=jnp.float32)
            + b2_ref[...], 0.0).astype(jnp.bfloat16)
        # Mean pool (as Pool @ H2) + fused heads, lane-dense store.
        g = jnp.dot(pool_ref[...], h2, preferred_element_type=jnp.float32
                    ).astype(jnp.bfloat16)
        logits = jnp.dot(g, wh_ref[...], preferred_element_type=jnp.float32
                         ) + bh_ref[...]
        out_ref[...] = _heads_epilogue(logits, num_actions)
    return kernel


def _fused_forward(a_bf16, xw1_bf16, b1_f32, w2_bf16, b2_f32,
                   pool_bf16, wh_bf16, bh_f32, num_actions):
    n_pad = a_bf16.shape[0]
    g_pad = pool_bf16.shape[0]
    hw = wh_bf16.shape[1]
    return pl.pallas_call(
        _make_fused_kernel(num_actions),
        out_shape=jax.ShapeDtypeStruct((g_pad, hw), jnp.float32),
        grid=(1,),
        in_specs=[
            pl.BlockSpec((n_pad, n_pad), lambda i: (0, 0)),     # A_hat
            pl.BlockSpec((n_pad, HIDDEN), lambda i: (0, 0)),    # X @ W1
            pl.BlockSpec((1, HIDDEN), lambda i: (0, 0)),        # b1
            pl.BlockSpec((HIDDEN, HIDDEN), lambda i: (0, 0)),   # W2
            pl.BlockSpec((1, HIDDEN), lambda i: (0, 0)),        # b2
            pl.BlockSpec((g_pad, n_pad), lambda i: (0, 0)),     # pool
            pl.BlockSpec((HIDDEN, hw), lambda i: (0, 0)),       # fused heads W
            pl.BlockSpec((1, hw), lambda i: (0, 0)),            # fused heads b
        ],
        out_specs=pl.BlockSpec((g_pad, hw), lambda i: (0, 0)),
        compiler_params=pltpu.CompilerParams(
            dimension_semantics=("arbitrary",)),
    )(a_bf16, xw1_bf16, b1_f32, w2_bf16, b2_f32, pool_bf16, wh_bf16, bh_f32)


# ----------------------------------------------------------------------------
# Tiled kernels (large boards): A tiled (i, k); XW / H1 resident in VMEM
# ----------------------------------------------------------------------------
def _make_layer1_kernel(tile_n):
    def kernel(a_ref, xw_ref, b_ref, out_ref, acc_ref):
        k = pl.program_id(1)

        @pl.when(k == 0)
        def _():
            acc_ref[...] = jnp.zeros_like(acc_ref)

        start = pl.multiple_of(k * tile_n, tile_n)
        acc_ref[...] += jnp.dot(a_ref[...], xw_ref[pl.ds(start, tile_n), :],
                                preferred_element_type=jnp.float32)

        @pl.when(k == pl.num_programs(1) - 1)
        def _():
            out_ref[...] = jnp.maximum(acc_ref[...] + b_ref[...], 0.0
                                       ).astype(out_ref.dtype)
    return kernel


def _make_layer2_kernel(tile_n):
    # H2 = ReLU((A @ H1) @ W2 + b2): W2 matmul folded into the finalize.
    def kernel(a_ref, h1_ref, w2_ref, b_ref, out_ref, acc_ref):
        k = pl.program_id(1)

        @pl.when(k == 0)
        def _():
            acc_ref[...] = jnp.zeros_like(acc_ref)

        start = pl.multiple_of(k * tile_n, tile_n)
        acc_ref[...] += jnp.dot(a_ref[...], h1_ref[pl.ds(start, tile_n), :],
                                preferred_element_type=jnp.float32)

        @pl.when(k == pl.num_programs(1) - 1)
        def _():
            ah1 = acc_ref[...].astype(jnp.bfloat16)
            h2 = jnp.dot(ah1, w2_ref[...],
                         preferred_element_type=jnp.float32) + b_ref[...]
            out_ref[...] = jnp.maximum(h2, 0.0).astype(out_ref.dtype)
    return kernel


def _make_pool_heads_kernel(num_actions):
    def kernel(pool_ref, h_ref, wh_ref, bh_ref, out_ref, acc_ref):
        k = pl.program_id(0)

        @pl.when(k == 0)
        def _():
            acc_ref[...] = jnp.zeros_like(acc_ref)

        acc_ref[...] += jnp.dot(pool_ref[...], h_ref[...],
                                preferred_element_type=jnp.float32)

        @pl.when(k == pl.num_programs(0) - 1)
        def _():
            g = acc_ref[...].astype(jnp.bfloat16)
            logits = jnp.dot(g, wh_ref[...],
                             preferred_element_type=jnp.float32) + bh_ref[...]
            out_ref[...] = _heads_epilogue(logits, num_actions)
    return kernel


def _gcn_layer1_tiled(a_bf16, xw1_bf16, b1_f32):
    n_pad = a_bf16.shape[0]
    n_tiles = n_pad // TILE
    return pl.pallas_call(
        _make_layer1_kernel(TILE),
        out_shape=jax.ShapeDtypeStruct((n_pad, HIDDEN), jnp.bfloat16),
        grid=(n_tiles, n_tiles),
        in_specs=[
            pl.BlockSpec((TILE, TILE), lambda i, k: (i, k)),     # A tile
            pl.BlockSpec((n_pad, HIDDEN), lambda i, k: (0, 0)),  # XW resident
            pl.BlockSpec((1, HIDDEN), lambda i, k: (0, 0)),      # bias
        ],
        out_specs=pl.BlockSpec((TILE, HIDDEN), lambda i, k: (i, 0)),
        scratch_shapes=[pltpu.VMEM((TILE, HIDDEN), jnp.float32)],
        compiler_params=pltpu.CompilerParams(
            dimension_semantics=("parallel", "arbitrary")),
    )(a_bf16, xw1_bf16, b1_f32)


def _gcn_layer2_tiled(a_bf16, h1_bf16, w2_bf16, b2_f32):
    n_pad = a_bf16.shape[0]
    n_tiles = n_pad // TILE
    return pl.pallas_call(
        _make_layer2_kernel(TILE),
        out_shape=jax.ShapeDtypeStruct((n_pad, HIDDEN), jnp.bfloat16),
        grid=(n_tiles, n_tiles),
        in_specs=[
            pl.BlockSpec((TILE, TILE), lambda i, k: (i, k)),     # A tile
            pl.BlockSpec((n_pad, HIDDEN), lambda i, k: (0, 0)),  # H1 resident
            pl.BlockSpec((HIDDEN, HIDDEN), lambda i, k: (0, 0)), # W2
            pl.BlockSpec((1, HIDDEN), lambda i, k: (0, 0)),      # bias
        ],
        out_specs=pl.BlockSpec((TILE, HIDDEN), lambda i, k: (i, 0)),
        scratch_shapes=[pltpu.VMEM((TILE, HIDDEN), jnp.float32)],
        compiler_params=pltpu.CompilerParams(
            dimension_semantics=("parallel", "arbitrary")),
    )(a_bf16, h1_bf16, w2_bf16, b2_f32)


def _pool_heads_tiled(pool_bf16, h2_bf16, wh_bf16, bh_f32, num_actions):
    # TODO(synk): could be fused into the layer-2 finalize to drop the H2
    #             HBM roundtrip entirely (review "optional" item).
    g_pad, n_pad = pool_bf16.shape
    hw = wh_bf16.shape[1]
    n_tiles = n_pad // TILE
    return pl.pallas_call(
        _make_pool_heads_kernel(num_actions),
        out_shape=jax.ShapeDtypeStruct((g_pad, hw), jnp.float32),
        grid=(n_tiles,),
        in_specs=[
            pl.BlockSpec((g_pad, TILE), lambda k: (0, k)),
            pl.BlockSpec((TILE, HIDDEN), lambda k: (k, 0)),
            pl.BlockSpec((HIDDEN, hw), lambda k: (0, 0)),
            pl.BlockSpec((1, hw), lambda k: (0, 0)),
        ],
        out_specs=pl.BlockSpec((g_pad, hw), lambda k: (0, 0)),
        scratch_shapes=[pltpu.VMEM((g_pad, HIDDEN), jnp.float32)],
        compiler_params=pltpu.CompilerParams(
            dimension_semantics=("arbitrary",)),
    )(pool_bf16, h2_bf16, wh_bf16, bh_f32)


# ----------------------------------------------------------------------------
# XLA glue: padded normalized adjacency / mean-pool (built at padded size)
# ----------------------------------------------------------------------------
def build_gcn_adjacency_padded(edge_index, edge_weight, num_nodes, n_pad):
    """D^-1/2 (A + I) D^-1/2 (PyG gcn_norm), built directly at (n_pad, n_pad)."""
    src = edge_index[0]
    dst = edge_index[1]
    w = edge_weight.reshape(-1).astype(jnp.float32)
    A = jnp.zeros((n_pad, n_pad), jnp.float32).at[dst, src].add(w)
    idx = jnp.arange(n_pad)
    A = A.at[idx, idx].add((idx < num_nodes).astype(jnp.float32))  # self loops
    deg = jnp.sum(A, axis=1)
    dinv = jnp.where(deg > 0, lax.rsqrt(jnp.maximum(deg, 1e-30)), 0.0)
    return dinv[:, None] * A * dinv[None, :]


def build_mean_pool_padded(batch, num_graphs, g_pad, n_pad):
    n = batch.shape[0]
    batch_pad = jnp.full((n_pad,), num_graphs, jnp.int32).at[:n].set(batch)
    onehot = (batch_pad[None, :] == jnp.arange(g_pad)[:, None]).astype(jnp.float32)
    counts = jnp.sum(onehot, axis=1, keepdims=True)
    return onehot / jnp.maximum(counts, 1.0)


def _fuse_heads(params, hw, num_actions):
    """Lane-padded fused head weights: col 0 = value, cols 1..P = policy."""
    w = (jnp.zeros((HIDDEN, hw), jnp.float32)
         .at[:, 0:1].set(params["wv"])
         .at[:, 1:1 + num_actions].set(params["wp"]))
    b = (jnp.zeros((1, hw), jnp.float32)
         .at[:, 0:1].set(params["bv"])
         .at[:, 1:1 + num_actions].set(params["bp"]))
    return w.astype(jnp.bfloat16), b


def init_params(key, node_features, num_actions):
    ks = jax.random.split(key, 4)

    def glorot(k, fan_in, fan_out):
        lim = jnp.sqrt(6.0 / (fan_in + fan_out))
        return jax.random.uniform(k, (fan_in, fan_out), jnp.float32, -lim, lim)

    return {
        "w1": glorot(ks[0], node_features, HIDDEN),
        "b1": jnp.zeros((1, HIDDEN), jnp.float32),
        "w2": glorot(ks[1], HIDDEN, HIDDEN),
        "b2": jnp.zeros((1, HIDDEN), jnp.float32),
        "wv": glorot(ks[2], HIDDEN, 1),
        "bv": jnp.zeros((1, 1), jnp.float32),
        "wp": glorot(ks[3], HIDDEN, num_actions),
        "bp": jnp.zeros((1, num_actions), jnp.float32),
    }


# ----------------------------------------------------------------------------
# Forward pass (many board positions batched into one call)
# ----------------------------------------------------------------------------
def hive_gnn_forward(params, x, edge_index, edge_attr, batch, num_graphs):
    n, _ = x.shape
    num_actions = params["wp"].shape[1]
    hw = _round_up(1 + num_actions, 128)

    if n <= FUSE_MAX_NODES:
        n_pad = _round_up(max(n, 1), 128)   # lane-dense padding (multiple of 128)
        tiled = False
    else:
        n_pad = _round_up(n, TILE)
        tiled = True
    g_pad = _round_up(num_graphs, 16)       # bf16 sublane packing for the pool

    a_bf16 = build_gcn_adjacency_padded(edge_index, edge_attr, n, n_pad
                                        ).astype(jnp.bfloat16)
    pool_bf16 = build_mean_pool_padded(batch, num_graphs, g_pad, n_pad
                                       ).astype(jnp.bfloat16)

    # X @ W1 in plain XLA: K = node_features (e.g. 4) is degenerate MXU work.
    xw1 = jnp.zeros((n_pad, HIDDEN), jnp.float32).at[:n].set(
        x.astype(jnp.float32) @ params["w1"])
    xw1_bf16 = xw1.astype(jnp.bfloat16)

    w2_bf16 = params["w2"].astype(jnp.bfloat16)
    wh_bf16, bh_f32 = _fuse_heads(params, hw, num_actions)

    if not tiled:
        out = _fused_forward(a_bf16, xw1_bf16, params["b1"], w2_bf16,
                             params["b2"], pool_bf16, wh_bf16, bh_f32,
                             num_actions)
    else:
        h1 = _gcn_layer1_tiled(a_bf16, xw1_bf16, params["b1"])
        h2 = _gcn_layer2_tiled(a_bf16, h1, w2_bf16, params["b2"])
        out = _pool_heads_tiled(pool_bf16, h2, wh_bf16, bh_f32, num_actions)

    v = out[:num_graphs, 0:1]
    p = out[:num_graphs, 1:1 + num_actions]
    return v, p


# Pure-JAX f32 reference (mirrors the PyTorch module) for correctness checks.
def hive_gnn_reference(params, x, edge_index, edge_attr, batch, num_graphs):
    n = x.shape[0]
    a = build_gcn_adjacency_padded(edge_index, edge_attr, n, n)
    pool = build_mean_pool_padded(batch, num_graphs, num_graphs, n)
    h1 = jnp.maximum(a @ (x.astype(jnp.float32) @ params["w1"]) + params["b1"], 0.0)
    h2 = jnp.maximum(a @ (h1 @ params["w2"]) + params["b2"], 0.0)
    g = pool @ h2
    v = jnp.tanh(g @ params["wv"] + params["bv"])
    p = jax.nn.softmax(g @ params["wp"] + params["bp"], axis=-1)
    return v, p


# ----------------------------------------------------------------------------
if __name__ == "__main__":
    node_features = 4
    num_actions = 16

    key = jax.random.PRNGKey(0)
    k_param, k_x1, k_w1, k_x2, k_w2 = jax.random.split(key, 5)
    params = init_params(k_param, node_features, num_actions)

    def make_ring_batch(num_graphs, nodes_per_graph, kx, kw):
        num_nodes = num_graphs * nodes_per_graph
        x = jax.random.normal(kx, (num_nodes, node_features), jnp.float32)
        src, dst = [], []
        for g in range(num_graphs):
            base = g * nodes_per_graph
            for i in range(nodes_per_graph):
                a, b = base + i, base + (i + 1) % nodes_per_graph
                src += [a, b]
                dst += [b, a]
        edge_index = jnp.array([src, dst], dtype=jnp.int32)
        edge_attr = jax.random.uniform(kw, (edge_index.shape[1],),
                                       jnp.float32, 0.5, 1.5)
        batch = jnp.repeat(jnp.arange(num_graphs, dtype=jnp.int32),
                           nodes_per_graph)
        return x, edge_index, edge_attr, batch

    def check(v, p, vr, pr, num_graphs):
        assert v.shape == (num_graphs, 1)
        assert p.shape == (num_graphs, num_actions)
        assert bool(jnp.all(jnp.isfinite(v))) and bool(jnp.all(jnp.isfinite(p)))
        assert bool(jnp.all(jnp.abs(v) <= 1.0 + 1e-5))
        assert bool(jnp.allclose(jnp.sum(p, axis=-1), 1.0, atol=1e-3))
        # bf16 MXU operands vs f32 reference -> loose tolerance
        assert bool(jnp.allclose(v, vr, atol=6e-2))
        assert bool(jnp.allclose(p, pr, atol=6e-2))

    # Small batch (16 boards x 4 nodes = 64 nodes) -> fully fused single call.
    x, ei, ea, b = make_ring_batch(16, 4, k_x1, k_w1)
    v, p = hive_gnn_forward(params, x, ei, ea, b, 16)
    jax.block_until_ready((v, p))
    vr, pr = hive_gnn_reference(params, x, ei, ea, b, 16)
    check(v, p, vr, pr, 16)

    # Medium batch (150 boards x 4 nodes = 600 nodes -> n_pad=1024) -> tiled
    # path with a 2x2 (row, k) grid at TILE=512 and resident XW / H1.
    x2, ei2, ea2, b2 = make_ring_batch(150, 4, k_x2, k_w2)
    v2, p2 = hive_gnn_forward(params, x2, ei2, ea2, b2, 150)
    jax.block_until_ready((v2, p2))
    vr2, pr2 = hive_gnn_reference(params, x2, ei2, ea2, b2, 150)
    check(v2, p2, vr2, pr2, 150)

    print("KERNEL_OK")
</pallas_src>

<mosaic_0001>
module attributes {stable_mosaic.version = 11 : i64} {
  func.func @kernel(%arg0: i32, %arg1: memref<128x128xbf16, #tpu.memory_space<vmem>>, %arg2: memref<128x128xbf16, #tpu.memory_space<vmem>>, %arg3: memref<1x128xf32, #tpu.memory_space<vmem>>, %arg4: memref<128x128xbf16, #tpu.memory_space<vmem>>, %arg5: memref<1x128xf32, #tpu.memory_space<vmem>>, %arg6: memref<16x128xbf16, #tpu.memory_space<vmem>>, %arg7: memref<128x128xbf16, #tpu.memory_space<vmem>>, %arg8: memref<1x128xf32, #tpu.memory_space<vmem>>, %arg9: memref<16x128xf32, #tpu.memory_space<vmem>>) attributes {dimension_semantics = [#tpu.dimension_semantics<arbitrary>], iteration_bounds = array<i64: 1>, scalar_prefetch = 0 : i64, scratch_operands = 0 : i64, tpu.core_type = #tpu.core_type<tc>, window_params = [{pipeline_mode = #tpu.pipeline_mode<synchronous>, transform_indices = @transform_0, window_bounds = array<i64: 128, 128>}, {pipeline_mode = #tpu.pipeline_mode<synchronous>, transform_indices = @transform_1, window_bounds = array<i64: 128, 128>}, {pipeline_mode = #tpu.pipeline_mode<synchronous>, transform_indices = @transform_2, window_bounds = array<i64: 1, 128>}, {pipeline_mode = #tpu.pipeline_mode<synchronous>, transform_indices = @transform_3, window_bounds = array<i64: 128, 128>}, {pipeline_mode = #tpu.pipeline_mode<synchronous>, transform_indices = @transform_4, window_bounds = array<i64: 1, 128>}, {pipeline_mode = #tpu.pipeline_mode<synchronous>, transform_indices = @transform_5, window_bounds = array<i64: 16, 128>}, {pipeline_mode = #tpu.pipeline_mode<synchronous>, transform_indices = @transform_6, window_bounds = array<i64: 128, 128>}, {pipeline_mode = #tpu.pipeline_mode<synchronous>, transform_indices = @transform_7, window_bounds = array<i64: 1, 128>}, {pipeline_mode = #tpu.pipeline_mode<synchronous>, transform_indices = @transform_8, window_bounds = array<i64: 16, 128>}]} {
    %c0 = arith.constant 0 : index
    %c0_0 = arith.constant 0 : index
    %0 = vector.load %arg1[%c0, %c0_0] : memref<128x128xbf16, #tpu.memory_space<vmem>>, vector<128x128xbf16>
    %c0_1 = arith.constant 0 : index
    %c0_2 = arith.constant 0 : index
    %1 = vector.load %arg2[%c0_1, %c0_2] : memref<128x128xbf16, #tpu.memory_space<vmem>>, vector<128x128xbf16>
    %cst = arith.constant dense<0.000000e+00> : vector<128x128xf32>
    %2 = tpu.matmul %0, %1, %cst {dimension_numbers = #tpu.dot_dimension_numbers<[1], [0], [0], [1], [0, 0, 1, 1], [], []>} : vector<128x128xbf16>, vector<128x128xbf16>, vector<128x128xf32> -> vector<128x128xf32>
    %c0_3 = arith.constant 0 : index
    %c0_4 = arith.constant 0 : index
    %3 = vector.load %arg3[%c0_3, %c0_4] : memref<1x128xf32, #tpu.memory_space<vmem>>, vector<1x128xf32>
    %4 = vector.broadcast %3 : vector<1x128xf32> to vector<128x128xf32>
    %5 = arith.addf %2, %4 : vector<128x128xf32>
    %cst_5 = arith.constant 0.000000e+00 : f32
    %6 = vector.broadcast %cst_5 : f32 to vector<128x128xf32>
    %7 = arith.maximumf %5, %6 : vector<128x128xf32>
    %8 = arith.truncf %7 : vector<128x128xf32> to vector<128x128xbf16>
    %cst_6 = arith.constant dense<0.000000e+00> : vector<128x128xf32>
    %9 = tpu.matmul %0, %8, %cst_6 {dimension_numbers = #tpu.dot_dimension_numbers<[1], [0], [0], [1], [0, 0, 1, 1], [], []>} : vector<128x128xbf16>, vector<128x128xbf16>, vector<128x128xf32> -> vector<128x128xf32>
    %10 = arith.truncf %9 : vector<128x128xf32> to vector<128x128xbf16>
    %c0_7 = arith.constant 0 : index
    %c0_8 = arith.constant 0 : index
    %11 = vector.load %arg4[%c0_7, %c0_8] : memref<128x128xbf16, #tpu.memory_space<vmem>>, vector<128x128xbf16>
    %cst_9 = arith.constant dense<0.000000e+00> : vector<128x128xf32>
    %12 = tpu.matmul %10, %11, %cst_9 {dimension_numbers = #tpu.dot_dimension_numbers<[1], [0], [0], [1], [0, 0, 1, 1], [], []>} : vector<128x128xbf16>, vector<128x128xbf16>, vector<128x128xf32> -> vector<128x128xf32>
    %c0_10 = arith.constant 0 : index
    %c0_11 = arith.constant 0 : index
    %13 = vector.load %arg5[%c0_10, %c0_11] : memref<1x128xf32, #tpu.memory_space<vmem>>, vector<1x128xf32>
    %14 = vector.broadcast %13 : vector<1x128xf32> to vector<128x128xf32>
    %15 = arith.addf %12, %14 : vector<128x128xf32>
    %cst_12 = arith.constant 0.000000e+00 : f32
    %16 = vector.broadcast %cst_12 : f32 to vector<128x128xf32>
    %17 = arith.maximumf %15, %16 : vector<128x128xf32>
    %18 = arith.truncf %17 : vector<128x128xf32> to vector<128x128xbf16>
    %c0_13 = arith.constant 0 : index
    %c0_14 = arith.constant 0 : index
    %19 = vector.load %arg6[%c0_13, %c0_14] : memref<16x128xbf16, #tpu.memory_space<vmem>>, vector<16x128xbf16>
    %cst_15 = arith.constant dense<0.000000e+00> : vector<16x128xf32>
    %20 = tpu.matmul %19, %18, %cst_15 {dimension_numbers = #tpu.dot_dimension_numbers<[1], [0], [0], [1], [0, 0, 1, 1], [], []>} : vector<16x128xbf16>, vector<128x128xbf16>, vector<16x128xf32> -> vector<16x128xf32>
    %21 = arith.truncf %20 : vector<16x128xf32> to vector<16x128xbf16>
    %c0_16 = arith.constant 0 : index
    %c0_17 = arith.constant 0 : index
    %22 = vector.load %arg7[%c0_16, %c0_17] : memref<128x128xbf16, #tpu.memory_space<vmem>>, vector<128x128xbf16>
    %cst_18 = arith.constant dense<0.000000e+00> : vector<16x128xf32>
    %23 = tpu.matmul %21, %22, %cst_18 {dimension_numbers = #tpu.dot_dimension_numbers<[1], [0], [0], [1], [0, 0, 1, 1], [], []>} : vector<16x128xbf16>, vector<128x128xbf16>, vector<16x128xf32> -> vector<16x128xf32>
    %c0_19 = arith.constant 0 : index
    %c0_20 = arith.constant 0 : index
    %24 = vector.load %arg8[%c0_19, %c0_20] : memref<1x128xf32, #tpu.memory_space<vmem>>, vector<1x128xf32>
    %25 = vector.broadcast %24 : vector<1x128xf32> to vector<16x128xf32>
    %26 = arith.addf %23, %25 : vector<16x128xf32>
    %27 = tpu.iota {dimensions = array<i32: 1>} : vector<16x128xi32>
    %c0_i32 = arith.constant 0 : i32
    %28 = vector.broadcast %c0_i32 : i32 to vector<16x128xi32>
    %29 = arith.cmpi eq, %27, %28 : vector<16x128xi32>
    %c1_i32 = arith.constant 1 : i32
    %30 = vector.broadcast %c1_i32 : i32 to vector<16x128xi32>
    %31 = arith.cmpi sge, %27, %30 : vector<16x128xi32>
    %c16_i32 = arith.constant 16 : i32
    %32 = vector.broadcast %c16_i32 : i32 to vector<16x128xi32>
    %33 = arith.cmpi sle, %27, %32 : vector<16x128xi32>
    %34 = arith.andi %31, %33 : vector<16x128xi1>
    %cst_21 = arith.constant -1.000000e+30 : f32
    %35 = vector.broadcast %cst_21 : f32 to vector<16x128xf32>
    %36 = arith.select %34, %26, %35 : vector<16x128xi1>, vector<16x128xf32>
    %cst_22 = arith.constant dense<0xFF800000> : vector<16xf32>
    %37 = vector.multi_reduction <maximumf>, %36, %cst_22 [1] : vector<16x128xf32> to vector<16xf32>
    %38 = vector.shape_cast %37 : vector<16xf32> to vector<16x1xf32>
    %39 = vector.broadcast %38 : vector<16x1xf32> to vector<16x128xf32>
    %40 = arith.subf %36, %39 : vector<16x128xf32>
    %41 = math.exp %40 : vector<16x128xf32>
    %cst_23 = arith.constant 0.000000e+00 : f32
    %42 = vector.broadcast %cst_23 : f32 to vector<16x128xf32>
    %43 = arith.select %34, %41, %42 : vector<16x128xi1>, vector<16x128xf32>
    %cst_24 = arith.constant dense<0.000000e+00> : vector<16xf32>
    %44 = vector.multi_reduction <add>, %43, %cst_24 [1] : vector<16x128xf32> to vector<16xf32>
    %45 = vector.shape_cast %44 : vector<16xf32> to vector<16x1xf32>
    %46 = vector.broadcast %45 : vector<16x1xf32> to vector<16x128xf32>
    %47 = arith.divf %43, %46 : vector<16x128xf32>
    %48 = math.tanh %26 : vector<16x128xf32>
    %49 = arith.select %29, %48, %47 : vector<16x128xi1>, vector<16x128xf32>
    %c0_25 = arith.constant 0 : index
    %c0_26 = arith.constant 0 : index
    %50 = vector.load %arg9[%c0_25, %c0_26] : memref<16x128xf32, #tpu.memory_space<vmem>>, vector<16x128xf32>
    tpu.vector_store %arg9[%c0_25, %c0_26], %49 {strides = array<i32>} : memref<16x128xf32, #tpu.memory_space<vmem>>, vector<16x128xf32>,
    return
  }
  func.func @transform_0(%arg0: i32) -> (i32, i32) {
    %c0_i32 = arith.constant 0 : i32
    %c0_i32_0 = arith.constant 0 : i32
    %c0_i32_1 = arith.constant 0 : i32
    return %c0_i32, %c0_i32_0 : i32, i32
  }
  func.func @transform_1(%arg0: i32) -> (i32, i32) {
    %c0_i32 = arith.constant 0 : i32
    %c0_i32_0 = arith.constant 0 : i32
    %c0_i32_1 = arith.constant 0 : i32
    return %c0_i32, %c0_i32_0 : i32, i32
  }
  func.func @transform_2(%arg0: i32) -> (i32, i32) {
    %c0_i32 = arith.constant 0 : i32
    %c0_i32_0 = arith.constant 0 : i32
    %c0_i32_1 = arith.constant 0 : i32
    return %c0_i32, %c0_i32_0 : i32, i32
  }
  func.func @transform_3(%arg0: i32) -> (i32, i32) {
    %c0_i32 = arith.constant 0 : i32
    %c0_i32_0 = arith.constant 0 : i32
    %c0_i32_1 = arith.constant 0 : i32
    return %c0_i32, %c0_i32_0 : i32, i32
  }
  func.func @transform_4(%arg0: i32) -> (i32, i32) {
    %c0_i32 = arith.constant 0 : i32
    %c0_i32_0 = arith.constant 0 : i32
    %c0_i32_1 = arith.constant 0 : i32
    return %c0_i32, %c0_i32_0 : i32, i32
  }
  func.func @transform_5(%arg0: i32) -> (i32, i32) {
    %c0_i32 = arith.constant 0 : i32
    %c0_i32_0 = arith.constant 0 : i32
    %c0_i32_1 = arith.constant 0 : i32
    return %c0_i32, %c0_i32_0 : i32, i32
  }
  func.func @transform_6(%arg0: i32) -> (i32, i32) {
    %c0_i32 = arith.constant 0 : i32
    %c0_i32_0 = arith.constant 0 : i32
    %c0_i32_1 = arith.constant 0 : i32
    return %c0_i32, %c0_i32_0 : i32, i32
  }
  func.func @transform_7(%arg0: i32) -> (i32, i32) {
    %c0_i32 = arith.constant 0 : i32
    %c0_i32_0 = arith.constant 0 : i32
    %c0_i32_1 = arith.constant 0 : i32
    return %c0_i32, %c0_i32_0 : i32, i32
  }
  func.func @transform_8(%arg0: i32) -> (i32, i32) {
    %c0_i32 = arith.constant 0 : i32
    %c0_i32_0 = arith.constant 0 : i32
    %c0_i32_1 = arith.constant 0 : i32
    return %c0_i32, %c0_i32_0 : i32, i32
  }
}

</mosaic_0001>

<llo_original>
// kernel: tpu_custom_call.1
$region0: #{tpu_custom_call.1}
  #allocation0 [shape = 'u32[]', space=smem, size = 0x4, offset = 0x4, fixed_abs, tag = 'smem constant byte address 0x4 - core index']
  #allocation1 [shape = 'u32[144,128]{1,0:T(1,128)}', space=vmem, size = 0x12000, scoped, tag = 'internal scratch']
  %s0 = inlined_call_operand.hbm [shape: bf16[128,128], index: 0, kind: input, shape index: {}]
  %s1 = inlined_call_operand.hbm [shape: bf16[128,128], index: 1, kind: input, shape index: {}]
  %s2 = inlined_call_operand.vmem [shape: f32[1,128], index: 2, kind: input, shape index: {}]
  %s3 = inlined_call_operand.hbm [shape: bf16[128,128], index: 3, kind: input, shape index: {}]
  %s4 = inlined_call_operand.vmem [shape: f32[1,128], index: 4, kind: input, shape index: {}]
  %s5 = inlined_call_operand.vmem [shape: bf16[16,128], index: 5, kind: input, shape index: {}]
  %s6 = inlined_call_operand.hbm [shape: bf16[128,128], index: 6, kind: input, shape index: {}]
  %s7 = inlined_call_operand.vmem [shape: f32[1,128], index: 7, kind: input, shape index: {}]
  %s8 = inlined_call_operand.hbm [shape: f32[16,128], index: 8, kind: output, shape index: {}]
  %s9 = sld [smem:[#allocation0]]
  $region58: #{tpu_custom_call.1} parent=0
    _
  %s11 = ssub.s32 1, %s9
  %s12 = scalar_select 0, %s11, %s9
  $region1: #{tpu_custom_call.1} parent=0
    #allocation2 [shape = 'u8[32768]{0}', space=vmem, size = 0x8000, scoped, tag = 'input window, operand 0, single buffered']
    #allocation3 [shape = 's32[1]{0}', space=sflag, size = 0x4, scoped, tag = 'scoped memory for tpu_custom_call.1']
    #allocation4 [shape = 's32[1]{0}', space=sflag, size = 0x4, scoped, tag = 'scoped memory for tpu_custom_call.1']
    #allocation5 [shape = 'u8[32768]{0}', space=vmem, size = 0x8000, scoped, tag = 'input window, operand 1, single buffered']
    #allocation6 [shape = 's32[1]{0}', space=sflag, size = 0x4, scoped, tag = 'scoped memory for tpu_custom_call.1']
    #allocation7 [shape = 'u8[32768]{0}', space=vmem, size = 0x8000, scoped, tag = 'input window, operand 3, single buffered']
    #allocation8 [shape = 'u8[32768]{0}', space=vmem, size = 0x8000, scoped, tag = 'input window, operand 6, single buffered']
    #allocation9 [shape = 's32[1]{0}', space=sflag, size = 0x4, scoped, tag = 'scoped memory for tpu_custom_call.1']
    #allocation10 [shape = 'u8[8192]{0}', space=vmem, size = 0x2000, scoped, tag = 'output window, operand 0, single buffered']
    %13 = vsyncpa [#allocation3], 0
    %14 = vsyncpa [#allocation6], 0
    %15 = vsyncpa [#allocation9], 0
    %16 = vsyncpa [#allocation4], 0
    // Predicated region
    $region2: #{tpu_custom_call.1} parent=1 // pred_check
      _
    $region3: #{tpu_custom_call.1} parent=1 // pred_check_branch
      %18 = sbr.rel (0) target = $region5
    $region4: #{tpu_custom_call.1} parent=1 // pred_region
      %s20 = ssub.s32 1024, 1024
      %21 = vsyncadd [#allocation3], %s20
      %s22 = sshll.u32 [#allocation2], 4
      %s23 = int_to_ptr.vmem [resolvable:$true] %s22
      %28 = dma.hbm_to_vmem [thread:$0]  %s0, 1024, %s23, [#allocation3], 64, 64, 4
    $region5: #{tpu_custom_call.1} parent=1 // pred_fallthru
      _
    // Predicated region
    $region6: #{tpu_custom_call.1} parent=1 // pred_check
      _
    $region7: #{tpu_custom_call.1} parent=1 // pred_check_branch
      %30 = sbr.rel (0) target = $region9
    $region8: #{tpu_custom_call.1} parent=1 // pred_region
      %s32 = ssub.s32 1024, 1024
      %33 = vsyncadd [#allocation6], %s32
      %s34 = sshll.u32 [#allocation5], 4
      %s35 = int_to_ptr.vmem [resolvable:$true] %s34
      %40 = dma.hbm_to_vmem [thread:$0]  %s1, 1024, %s35, [#allocation6], 64, 64, 4
    $region9: #{tpu_custom_call.1} parent=1 // pred_fallthru
      _
    // Predicated region
    $region10: #{tpu_custom_call.1} parent=1 // pred_check
      _
    $region11: #{tpu_custom_call.1} parent=1 // pred_check_branch
      %42 = sbr.rel (0) target = $region13
    $region12: #{tpu_custom_call.1} parent=1 // pred_region
      _
    $region13: #{tpu_custom_call.1} parent=1 // pred_fallthru
      _
    // Predicated region
    $region14: #{tpu_custom_call.1} parent=1 // pred_check
      _
    $region15: #{tpu_custom_call.1} parent=1 // pred_check_branch
      %44 = sbr.rel (0) target = $region17
    $region16: #{tpu_custom_call.1} parent=1 // pred_region
      %s46 = ssub.s32 1024, 1024
      %47 = vsyncadd [#allocation6], %s46
      %s48 = sshll.u32 [#allocation7], 4
      %s49 = int_to_ptr.vmem [resolvable:$true] %s48
      %54 = dma.hbm_to_vmem [thread:$0]  %s3, 1024, %s49, [#allocation6], 64, 64, 4
    $region17: #{tpu_custom_call.1} parent=1 // pred_fallthru
      _
    // Predicated region
    $region18: #{tpu_custom_call.1} parent=1 // pred_check
      _
    $region19: #{tpu_custom_call.1} parent=1 // pred_check_branch
      %56 = sbr.rel (0) target = $region21
    $region20: #{tpu_custom_call.1} parent=1 // pred_region
      _
    $region21: #{tpu_custom_call.1} parent=1 // pred_fallthru
      _
    // Predicated region
    $region22: #{tpu_custom_call.1} parent=1 // pred_check
      _
    $region23: #{tpu_custom_call.1} parent=1 // pred_check_branch
      %58 = sbr.rel (0) target = $region25
    $region24: #{tpu_custom_call.1} parent=1 // pred_region
      _
    $region25: #{tpu_custom_call.1} parent=1 // pred_fallthru
      _
    // Predicated region
    $region26: #{tpu_custom_call.1} parent=1 // pred_check
      _
    $region27: #{tpu_custom_call.1} parent=1 // pred_check_branch
      %60 = sbr.rel (0) target = $region29
    $region28: #{tpu_custom_call.1} parent=1 // pred_region
      %s62 = ssub.s32 1024, 1024
      %63 = vsyncadd [#allocation9], %s62
      %s64 = sshll.u32 [#allocation8], 4
      %s65 = int_to_ptr.vmem [resolvable:$true] %s64
      %70 = dma.hbm_to_vmem [thread:$0]  %s6, 1024, %s65, [#allocation9], 64, 64, 4
    $region29: #{tpu_custom_call.1} parent=1 // pred_fallthru
      _
    // Predicated region
    $region30: #{tpu_custom_call.1} parent=1 // pred_check
      _
    $region31: #{tpu_custom_call.1} parent=1 // pred_check_branch
      %72 = sbr.rel (0) target = $region33
    $region32: #{tpu_custom_call.1} parent=1 // pred_region
      _
    $region33: #{tpu_custom_call.1} parent=1 // pred_fallthru
      _
    // Predicated region
    $region34: #{tpu_custom_call.1} parent=1 // pred_check
      _
    $region35: #{tpu_custom_call.1} parent=1 // pred_check_branch
      %74 = sbr.rel (0) target = $region37
    $region36: #{tpu_custom_call.1} parent=1 // pred_region
      %75 = dma.done [#allocation3], 1024
    $region37: #{tpu_custom_call.1} parent=1 // pred_fallthru
      _
    // Predicated region
    $region38: #{tpu_custom_call.1} parent=1 // pred_check
      _
    $region39: #{tpu_custom_call.1} parent=1 // pred_check_branch
      %77 = sbr.rel (0) target = $region41
    $region40: #{tpu_custom_call.1} parent=1 // pred_region
      %78 = dma.done [#allocation6], 1024
    $region41: #{tpu_custom_call.1} parent=1 // pred_fallthru
      _
    // Predicated region
    $region42: #{tpu_custom_call.1} parent=1 // pred_check
      _
    $region43: #{tpu_custom_call.1} parent=1 // pred_check_branch
      %80 = sbr.rel (0) target = $region45
    $region44: #{tpu_custom_call.1} parent=1 // pred_region
      %81 = dma.done [#allocation6], 1024
    $region45: #{tpu_custom_call.1} parent=1 // pred_fallthru
      _
    // Predicated region
    $region46: #{tpu_custom_call.1} parent=1 // pred_check
      _
    $region47: #{tpu_custom_call.1} parent=1 // pred_check_branch
      %83 = sbr.rel (0) target = $region49
    $region48: #{tpu_custom_call.1} parent=1 // pred_region
      %84 = dma.done [#allocation9], 1024
    $region49: #{tpu_custom_call.1} parent=1 // pred_fallthru
      _
    %v86 = vld [vmem:[#allocation2] sm:$0xf]
    %v87 = vld [vmem:[#allocation2 + $0x4] sm:$0xf]
    %v88 = vld [vmem:[#allocation2 + $0x8] sm:$0xf]
    %v89 = vld [vmem:[#allocation2 + $0xc] sm:$0xf]
    %v90 = vld [vmem:[#allocation2 + $0x10] sm:$0xf]
    %v91 = vld [vmem:[#allocation2 + $0x14] sm:$0xf]
    %v92 = vld [vmem:[#allocation2 + $0x18] sm:$0xf]
    %v93 = vld [vmem:[#allocation2 + $0x1c] sm:$0xf]
    %v94 = vld [vmem:[#allocation2 + $0x20] sm:$0xf]
    %v95 = vld [vmem:[#allocation2 + $0x24] sm:$0xf]
    %v96 = vld [vmem:[#allocation2 + $0x28] sm:$0xf]
    %v97 = vld [vmem:[#allocation2 + $0x2c] sm:$0xf]
    %v98 = vld [vmem:[#allocation2 + $0x30] sm:$0xf]
    %v99 = vld [vmem:[#allocation2 + $0x34] sm:$0xf]
    %v100 = vld [vmem:[#allocation2 + $0x38] sm:$0xf]
    %v101 = vld [vmem:[#allocation2 + $0x3c] sm:$0xf]
    %v102 = vld [vmem:[#allocation5] sm:$0xf]
    %v103 = vld [vmem:[#allocation5 + $0x4] sm:$0xf]
    %v104 = vld [vmem:[#allocation5 + $0x8] sm:$0xf]
    %v105 = vld [vmem:[#allocation5 + $0xc] sm:$0xf]
    %v106 = vld [vmem:[#allocation5 + $0x10] sm:$0xf]
    %v107 = vld [vmem:[#allocation5 + $0x14] sm:$0xf]
    %v108 = vld [vmem:[#allocation5 + $0x18] sm:$0xf]
    %v109 = vld [vmem:[#allocation5 + $0x1c] sm:$0xf]
    %v110 = vld [vmem:[#allocation5 + $0x20] sm:$0xf]
    %v111 = vld [vmem:[#allocation5 + $0x24] sm:$0xf]
    %v112 = vld [vmem:[#allocation5 + $0x28] sm:$0xf]
    %v113 = vld [vmem:[#allocation5 + $0x2c] sm:$0xf]
    %v114 = vld [vmem:[#allocation5 + $0x30] sm:$0xf]
    %v115 = vld [vmem:[#allocation5 + $0x34] sm:$0xf]
    %v116 = vld [vmem:[#allocation5 + $0x38] sm:$0xf]
    %v117 = vld [vmem:[#allocation5 + $0x3c] sm:$0xf]
    %v118 = vld [vmem:[%s2] sm:$0x1]
    %v120 = vlaneseq
    %v121 = vshrl.u32 %v120, 7
    %v122 = vsub.s32 0, %v121
    %v123 = vrot.slane %v118, %v122
    %v141 = vunpack.c.l.b16 %v86
    %v142 = vunpack.c.l.b16 %v87
    %v143 = vunpack.c.l.b16 %v88
    %v144 = vunpack.c.l.b16 %v89
    %v145 = vunpack.c.l.b16 %v90
    %v146 = vunpack.c.l.b16 %v91
    %v147 = vunpack.c.l.b16 %v92
    %v148 = vunpack.c.l.b16 %v93
    %v149 = vunpack.c.l.b16 %v94
    %v150 = vunpack.c.l.b16 %v95
    %v151 = vunpack.c.l.b16 %v96
    %v152 = vunpack.c.l.b16 %v97
    %v153 = vunpack.c.l.b16 %v98
    %v154 = vunpack.c.l.b16 %v99
    %v155 = vunpack.c.l.b16 %v100
    %v156 = vunpack.c.l.b16 %v101
    %v157 = vpack.c.b16 %v142, %v141
    %v158 = vpack.c.b16 %v144, %v143
    %v159 = vpack.c.b16 %v146, %v145
    %v160 = vpack.c.b16 %v148, %v147
    %v161 = vpack.c.b16 %v150, %v149
    %v162 = vpack.c.b16 %v152, %v151
    %v163 = vpack.c.b16 %v154, %v153
    %v164 = vpack.c.b16 %v156, %v155
    %v189 = vunpack.c.l.b16 %v102
    %v190 = vunpack.c.l.b16 %v103
    %v191 = vunpack.c.l.b16 %v104
    %v192 = vunpack.c.l.b16 %v105
    %v193 = vunpack.c.l.b16 %v106
    %v194 = vunpack.c.l.b16 %v107
    %v195 = vunpack.c.l.b16 %v108
    %v196 = vunpack.c.l.b16 %v109
    %v197 = vunpack.c.l.b16 %v110
    %v198 = vunpack.c.l.b16 %v111
    %v199 = vunpack.c.l.b16 %v112
    %v200 = vunpack.c.l.b16 %v113
    %v201 = vunpack.c.l.b16 %v114
    %v202 = vunpack.c.l.b16 %v115
    %v203 = vunpack.c.l.b16 %v116
    %v204 = vunpack.c.l.b16 %v117
    %v205 = vpack.c.b16 %v190, %v189
    %v206 = vpack.c.b16 %v192, %v191
    %v207 = vpack.c.b16 %v194, %v193
    %v208 = vpack.c.b16 %v196, %v195
    %v209 = vpack.c.b16 %v198, %v197
    %v210 = vpack.c.b16 %v200, %v199
    %v211 = vpack.c.b16 %v202, %v201
    %v212 = vpack.c.b16 %v204, %v203
    %221 = vmatprep.subr.bf16.mxu0 0
    %222 = vmatpush1.bf16.msra.mxu0 %v205
    %223 = vmatprep.subr.bf16.mxu0 0
    %224 = vmatpush1.bf16.msra.mxu0 %v206
    %225 = vmatprep.subr.bf16.mxu0 0
    %226 = vmatpush1.bf16.msra.mxu0 %v207
    %227 = vmatprep.subr.bf16.mxu0 0
    %228 = vmatpush1.bf16.msra.mxu0 %v208
    %229 = vmatprep.subr.bf16.mxu0 0
    %230 = vmatpush1.bf16.msra.mxu0 %v209
    %231 = vmatprep.subr.bf16.mxu0 0
    %232 = vmatpush1.bf16.msra.mxu0 %v210
    %233 = vmatprep.subr.bf16.mxu0 0
    %234 = vmatpush1.bf16.msra.mxu0 %v211
    %235 = vmatprep.subr.bf16.mxu0 0
    %236 = vmatpush1.bf16.msra.mxu0 %v212
    %237 = vmatprep.subr.bf16.mxu0 0
    %238 = vmatpush1.bf16.msra.mxu0 0
    %239 = vmatprep.subr.bf16.mxu0 0
    %240 = vmatpush1.bf16.msra.mxu0 0
    %241 = vmatprep.subr.bf16.mxu0 0
    %242 = vmatpush1.bf16.msra.mxu0 0
    %243 = vmatprep.subr.bf16.mxu0 0
    %244 = vmatpush1.bf16.msra.mxu0 0
    %245 = vmatprep.subr.bf16.mxu0 0
    %246 = vmatpush1.bf16.msra.mxu0 0
    %247 = vmatprep.subr.bf16.mxu0 0
    %248 = vmatpush1.bf16.msra.mxu0 0
    %249 = vmatprep.subr.bf16.mxu0 0
    %250 = vmatpush1.bf16.msra.mxu0 0
    %251 = vmatprep.subr.bf16.mxu0 0
    %252 = vmatpush1.bf16.msra.mxu0 0
    %253 = vmatprep.mubr.bf16.mxu0 0
    %254 = vmatmul.mubr.bf16.gmra.mrb[0].mxu0 %v157
    %v255 = vpop.f32.mrb[0].mxu0
    %v256 = vadd.f32 %v123, %v255
    %v257 = vpop.f32.mrb[0].mxu0
    %v258 = vpop.f32.mrb[0].mxu0
    %v259 = vadd.f32 %v123, %v258
    %v260 = vpop.f32.mrb[0].mxu0
    %261 = vmatprep.mubr.bf16.mxu0 0
    %262 = vmatmul.mubr.bf16.gmra.mrb[0].mxu0 %v158
    %v263 = vpop.f32.mrb[0].mxu0
    %v264 = vadd.f32 %v123, %v263
    %v265 = vpop.f32.mrb[0].mxu0
    %v266 = vpop.f32.mrb[0].mxu0
    %v267 = vadd.f32 %v123, %v266
    %v268 = vpop.f32.mrb[0].mxu0
    %269 = vmatprep.mubr.bf16.mxu0 0
    %270 = vmatmul.mubr.bf16.gmra.mrb[0].mxu0 %v159
    %v271 = vpop.f32.mrb[0].mxu0
    %v272 = vadd.f32 %v123, %v271
    %v273 = vpop.f32.mrb[0].mxu0
    %v274 = vpop.f32.mrb[0].mxu0
    %v275 = vadd.f32 %v123, %v274
    %v276 = vpop.f32.mrb[0].mxu0
    %277 = vmatprep.mubr.bf16.mxu0 0
    %278 = vmatmul.mubr.bf16.gmra.mrb[0].mxu0 %v160
    %v279 = vpop.f32.mrb[0].mxu0
    %v280 = vadd.f32 %v123, %v279
    %v281 = vpop.f32.mrb[0].mxu0
    %v282 = vpop.f32.mrb[0].mxu0
    %v283 = vadd.f32 %v123, %v282
    %v284 = vpop.f32.mrb[0].mxu0
    %285 = vmatprep.mubr.bf16.mxu0 0
    %286 = vmatmul.mubr.bf16.gmra.mrb[0].mxu0 %v161
    %v287 = vpop.f32.mrb[0].mxu0
    %v288 = vadd.f32 %v123, %v287
    %v289 = vpop.f32.mrb[0].mxu0
    %v290 = vpop.f32.mrb[0].mxu0
    %v291 = vadd.f32 %v123, %v290
    %v292 = vpop.f32.mrb[0].mxu0
    %293 = vmatprep.mubr.bf16.mxu0 0
    %294 = vmatmul.mubr.bf16.gmra.mrb[0].mxu0 %v162
    %v295 = vpop.f32.mrb[0].mxu0
    %v296 = vadd.f32 %v123, %v295
    %v297 = vpop.f32.mrb[0].mxu0
    %v298 = vpop.f32.mrb[0].mxu0
    %v299 = vadd.f32 %v123, %v298
    %v300 = vpop.f32.mrb[0].mxu0
    %301 = vmatprep.mubr.bf16.mxu0 0
    %302 = vmatmul.mubr.bf16.gmra.mrb[0].mxu0 %v163
    %v303 = vpop.f32.mrb[0].mxu0
    %v304 = vadd.f32 %v123, %v303
    %v305 = vpop.f32.mrb[0].mxu0
    %v306 = vpop.f32.mrb[0].mxu0
    %v307 = vadd.f32 %v123, %v306
    %v308 = vpop.f32.mrb[0].mxu0
    %309 = vmatprep.mubr.bf16.mxu0 0
    %310 = vmatmul.mubr.bf16.gmra.mrb[0].mxu0 %v164
    %v311 = vpop.f32.mrb[0].mxu0
    %v312 = vadd.f32 %v123, %v311
    %v313 = vpop.f32.mrb[0].mxu0
    %v314 = vpop.f32.mrb[0].mxu0
    %v315 = vadd.f32 %v123, %v314
    %v316 = vpop.f32.mrb[0].mxu0
    %317 = vdwg.mxu0
    %v318 = vmax.f32 %v256, 0.0
    %v319 = vmax.f32 %v259, 0.0
    %v320 = vmax.f32 %v264, 0.0
    %v321 = vmax.f32 %v267, 0.0
    %v322 = vmax.f32 %v272, 0.0
    %v323 = vmax.f32 %v275, 0.0
    %v324 = vmax.f32 %v280, 0.0
    %v325 = vmax.f32 %v283, 0.0
    %v326 = vmax.f32 %v288, 0.0
    %v327 = vmax.f32 %v291, 0.0
    %v328 = vmax.f32 %v296, 0.0
    %v329 = vmax.f32 %v299, 0.0
    %v330 = vmax.f32 %v304, 0.0
    %v331 = vmax.f32 %v307, 0.0
    %v332 = vmax.f32 %v312, 0.0
    %v333 = vmax.f32 %v315, 0.0
    %v334 = vpack.c.bf16 %v319, %v318
    %v335 = vpack.c.bf16 %v321, %v320
    %v336 = vpack.c.bf16 %v323, %v322
    %v337 = vpack.c.bf16 %v325, %v324
    %v338 = vpack.c.bf16 %v327, %v326
    %v339 = vpack.c.bf16 %v329, %v328
    %v340 = vpack.c.bf16 %v331, %v330
    %v341 = vpack.c.bf16 %v333, %v332
    %342 = vmatprep.subr.bf16.mxu0 0
    %343 = vmatpush1.bf16.msra.mxu0 %v334
    %344 = vmatprep.subr.bf16.mxu0 0
    %345 = vmatpush1.bf16.msra.mxu0 %v335
    %346 = vmatprep.subr.bf16.mxu0 0
    %347 = vmatpush1.bf16.msra.mxu0 %v336
    %348 = vmatprep.subr.bf16.mxu0 0
    %349 = vmatpush1.bf16.msra.mxu0 %v337
    %350 = vmatprep.subr.bf16.mxu0 0
    %351 = vmatpush1.bf16.msra.mxu0 %v338
    %352 = vmatprep.subr.bf16.mxu0 0
    %353 = vmatpush1.bf16.msra.mxu0 %v339
    %354 = vmatprep.subr.bf16.mxu0 0
    %355 = vmatpush1.bf16.msra.mxu0 %v340
    %356 = vmatprep.subr.bf16.mxu0 0
    %357 = vmatpush1.bf16.msra.mxu0 %v341
    %358 = vmatprep.subr.bf16.mxu0 0
    %359 = vmatpush1.bf16.msra.mxu0 0
    %360 = vmatprep.subr.bf16.mxu0 0
    %361 = vmatpush1.bf16.msra.mxu0 0
    %362 = vmatprep.subr.bf16.mxu0 0
    %363 = vmatpush1.bf16.msra.mxu0 0
    %364 = vmatprep.subr.bf16.mxu0 0
    %365 = vmatpush1.bf16.msra.mxu0 0
    %366 = vmatprep.subr.bf16.mxu0 0
    %367 = vmatpush1.bf16.msra.mxu0 0
    %368 = vmatprep.subr.bf16.mxu0 0
    %369 = vmatpush1.bf16.msra.mxu0 0
    %370 = vmatprep.subr.bf16.mxu0 0
    %371 = vmatpush1.bf16.msra.mxu0 0
    %372 = vmatprep.subr.bf16.mxu0 0
    %373 = vmatpush1.bf16.msra.mxu0 0
    %374 = vmatprep.mubr.bf16.mxu0 0
    %375 = vmatmul.mubr.bf16.gmra.mrb[0].mxu0 %v157
    %v376 = vpop.f32.mrb[0].mxu0
    %v377 = vadd.f32 0.0, %v376
    %v378 = vpop.f32.mrb[0].mxu0
    %v379 = vpop.f32.mrb[0].mxu0
    %v380 = vadd.f32 0.0, %v379
    %v381 = vpop.f32.mrb[0].mxu0
    %382 = vmatprep.mubr.bf16.mxu0 0
    %383 = vmatmul.mubr.bf16.gmra.mrb[0].mxu0 %v158
    %v384 = vpop.f32.mrb[0].mxu0
    %v385 = vadd.f32 0.0, %v384
    %v386 = vpop.f32.mrb[0].mxu0
    %v387 = vpop.f32.mrb[0].mxu0
    %v388 = vadd.f32 0.0, %v387
    %v389 = vpop.f32.mrb[0].mxu0
    %390 = vmatprep.mubr.bf16.mxu0 0
    %391 = vmatmul.mubr.bf16.gmra.mrb[0].mxu0 %v159
    %v392 = vpop.f32.mrb[0].mxu0
    %v393 = vadd.f32 0.0, %v392
    %v394 = vpop.f32.mrb[0].mxu0
    %v395 = vpop.f32.mrb[0].mxu0
    %v396 = vadd.f32 0.0, %v395
    %v397 = vpop.f32.mrb[0].mxu0
    %398 = vmatprep.mubr.bf16.mxu0 0
    %399 = vmatmul.mubr.bf16.gmra.mrb[0].mxu0 %v160
    %v400 = vpop.f32.mrb[0].mxu0
    %v401 = vadd.f32 0.0, %v400
    %v402 = vpop.f32.mrb[0].mxu0
    %v403 = vpop.f32.mrb[0].mxu0
    %v404 = vadd.f32 0.0, %v403
    %v405 = vpop.f32.mrb[0].mxu0
    %406 = vmatprep.mubr.bf16.mxu0 0
    %407 = vmatmul.mubr.bf16.gmra.mrb[0].mxu0 %v161
    %v408 = vpop.f32.mrb[0].mxu0
    %v409 = vadd.f32 0.0, %v408
    %v410 = vpop.f32.mrb[0].mxu0
    %v411 = vpop.f32.mrb[0].mxu0
    %v412 = vadd.f32 0.0, %v411
    %v413 = vpop.f32.mrb[0].mxu0
    %414 = vmatprep.mubr.bf16.mxu0 0
    %415 = vmatmul.mubr.bf16.gmra.mrb[0].mxu0 %v162
    %v416 = vpop.f32.mrb[0].mxu0
    %v417 = vadd.f32 0.0, %v416
    %v418 = vpop.f32.mrb[0].mxu0
    %v419 = vpop.f32.mrb[0].mxu0
    %v420 = vadd.f32 0.0, %v419
    %v421 = vpop.f32.mrb[0].mxu0
    %422 = vmatprep.mubr.bf16.mxu0 0
    %423 = vmatmul.mubr.bf16.gmra.mrb[0].mxu0 %v163
    %v424 = vpop.f32.mrb[0].mxu0
    %v425 = vadd.f32 0.0, %v424
    %v426 = vpop.f32.mrb[0].mxu0
    %v427 = vpop.f32.mrb[0].mxu0
    %v428 = vadd.f32 0.0, %v427
    %v429 = vpop.f32.mrb[0].mxu0
    %430 = vmatprep.mubr.bf16.mxu0 0
    %431 = vmatmul.mubr.bf16.gmra.mrb[0].mxu0 %v164
    %v432 = vpop.f32.mrb[0].mxu0
    %v433 = vadd.f32 0.0, %v432
    %v434 = vpop.f32.mrb[0].mxu0
    %v435 = vpop.f32.mrb[0].mxu0
    %v436 = vadd.f32 0.0, %v435
    %v437 = vpop.f32.mrb[0].mxu0
    %438 = vdwg.mxu0
    %v439 = vpack.c.bf16 %v380, %v377
    %v440 = vpack.c.bf16 %v388, %v385
    %v441 = vpack.c.bf16 %v396, %v393
    %v442 = vpack.c.bf16 %v404, %v401
    %v443 = vpack.c.bf16 %v412, %v409
    %v444 = vpack.c.bf16 %v420, %v417
    %v445 = vpack.c.bf16 %v428, %v425
    %v446 = vpack.c.bf16 %v436, %v433
    %v447 = vld [vmem:[#allocation7] sm:$0xf]
    %v448 = vld [vmem:[#allocation7 + $0x4] sm:$0xf]
    %v449 = vld [vmem:[#allocation7 + $0x8] sm:$0xf]
    %v450 = vld [vmem:[#allocation7 + $0xc] sm:$0xf]
    %v451 = vld [vmem:[#allocation7 + $0x10] sm:$0xf]
    %v452 = vld [vmem:[#allocation7 + $0x14] sm:$0xf]
    %v453 = vld [vmem:[#allocation7 + $0x18] sm:$0xf]
    %v454 = vld [vmem:[#allocation7 + $0x1c] sm:$0xf]
    %v455 = vld [vmem:[#allocation7 + $0x20] sm:$0xf]
    %v456 = vld [vmem:[#allocation7 + $0x24] sm:$0xf]
    %v457 = vld [vmem:[#allocation7 + $0x28] sm:$0xf]
    %v458 = vld [vmem:[#allocation7 + $0x2c] sm:$0xf]
    %v459 = vld [vmem:[#allocation7 + $0x30] sm:$0xf]
    %v460 = vld [vmem:[#allocation7 + $0x34] sm:$0xf]
    %v461 = vld [vmem:[#allocation7 + $0x38] sm:$0xf]
    %v462 = vld [vmem:[#allocation7 + $0x3c] sm:$0xf]
    %v463 = vld [vmem:[%s4] sm:$0x1]
    %v465 = vlaneseq
    %v466 = vshrl.u32 %v465, 7
    %v467 = vsub.s32 0, %v466
    %v468 = vrot.slane %v463, %v467
    %v486 = vunpack.c.l.b16 %v447
    %v487 = vunpack.c.l.b16 %v448
    %v488 = vunpack.c.l.b16 %v449
    %v489 = vunpack.c.l.b16 %v450
    %v490 = vunpack.c.l.b16 %v451
    %v491 = vunpack.c.l.b16 %v452
    %v492 = vunpack.c.l.b16 %v453
    %v493 = vunpack.c.l.b16 %v454
    %v494 = vunpack.c.l.b16 %v455
    %v495 = vunpack.c.l.b16 %v456
    %v496 = vunpack.c.l.b16 %v457
    %v497 = vunpack.c.l.b16 %v458
    %v498 = vunpack.c.l.b16 %v459
    %v499 = vunpack.c.l.b16 %v460
    %v500 = vunpack.c.l.b16 %v461
    %v501 = vunpack.c.l.b16 %v462
    %v502 = vpack.c.b16 %v487, %v486
    %v503 = vpack.c.b16 %v489, %v488
    %v504 = vpack.c.b16 %v491, %v490
    %v505 = vpack.c.b16 %v493, %v492
    %v506 = vpack.c.b16 %v495, %v494
    %v507 = vpack.c.b16 %v497, %v496
    %v508 = vpack.c.b16 %v499, %v498
    %v509 = vpack.c.b16 %v501, %v500
    %518 = vmatprep.subr.bf16.mxu0 0
    %519 = vmatpush1.bf16.msra.mxu0 %v502
    %520 = vmatprep.subr.bf16.mxu0 0
    %521 = vmatpush1.bf16.msra.mxu0 %v503
    %522 = vmatprep.subr.bf16.mxu0 0
    %523 = vmatpush1.bf16.msra.mxu0 %v504
    %524 = vmatprep.subr.bf16.mxu0 0
    %525 = vmatpush1.bf16.msra.mxu0 %v505
    %526 = vmatprep.subr.bf16.mxu0 0
    %527 = vmatpush1.bf16.msra.mxu0 %v506
    %528 = vmatprep.subr.bf16.mxu0 0
    %529 = vmatpush1.bf16.msra.mxu0 %v507
    %530 = vmatprep.subr.bf16.mxu0 0
    %531 = vmatpush1.bf16.msra.mxu0 %v508
    %532 = vmatprep.subr.bf16.mxu0 0
    %533 = vmatpush1.bf16.msra.mxu0 %v509
    %534 = vmatprep.subr.bf16.mxu0 0
    %535 = vmatpush1.bf16.msra.mxu0 0
    %536 = vmatprep.subr.bf16.mxu0 0
    %537 = vmatpush1.bf16.msra.mxu0 0
    %538 = vmatprep.subr.bf16.mxu0 0
    %539 = vmatpush1.bf16.msra.mxu0 0
    %540 = vmatprep.subr.bf16.mxu0 0
    %541 = vmatpush1.bf16.msra.mxu0 0
    %542 = vmatprep.subr.bf16.mxu0 0
    %543 = vmatpush1.bf16.msra.mxu0 0
    %544 = vmatprep.subr.bf16.mxu0 0
    %545 = vmatpush1.bf16.msra.mxu0 0
    %546 = vmatprep.subr.bf16.mxu0 0
    %547 = vmatpush1.bf16.msra.mxu0 0
    %548 = vmatprep.subr.bf16.mxu0 0
    %549 = vmatpush1.bf16.msra.mxu0 0
    %550 = vmatprep.mubr.bf16.mxu0 0
    %551 = vmatmul.mubr.bf16.gmra.mrb[0].mxu0 %v439
    %v552 = vpop.f32.mrb[0].mxu0
    %v553 = vadd.f32 %v468, %v552
    %v554 = vpop.f32.mrb[0].mxu0
    %v555 = vpop.f32.mrb[0].mxu0
    %v556 = vadd.f32 %v468, %v555
    %v557 = vpop.f32.mrb[0].mxu0
    %558 = vmatprep.mubr.bf16.mxu0 0
    %559 = vmatmul.mubr.bf16.gmra.mrb[0].mxu0 %v440
    %v560 = vpop.f32.mrb[0].mxu0
    %v561 = vadd.f32 %v468, %v560
    %v562 = vpop.f32.mrb[0].mxu0
    %v563 = vpop.f32.mrb[0].mxu0
    %v564 = vadd.f32 %v468, %v563
    %v565 = vpop.f32.mrb[0].mxu0
    %566 = vmatprep.mubr.bf16.mxu0 0
    %567 = vmatmul.mubr.bf16.gmra.mrb[0].mxu0 %v441
    %v568 = vpop.f32.mrb[0].mxu0
    %v569 = vadd.f32 %v468, %v568
    %v570 = vpop.f32.mrb[0].mxu0
    %v571 = vpop.f32.mrb[0].mxu0
    %v572 = vadd.f32 %v468, %v571
    %v573 = vpop.f32.mrb[0].mxu0
    %574 = vmatprep.mubr.bf16.mxu0 0
    %575 = vmatmul.mubr.bf16.gmra.mrb[0].mxu0 %v442
    %v576 = vpop.f32.mrb[0].mxu0
    %v577 = vadd.f32 %v468, %v576
    %v578 = vpop.f32.mrb[0].mxu0
    %v579 = vpop.f32.mrb[0].mxu0
    %v580 = vadd.f32 %v468, %v579
    %v581 = vpop.f32.mrb[0].mxu0
    %582 = vmatprep.mubr.bf16.mxu0 0
    %583 = vmatmul.mubr.bf16.gmra.mrb[0].mxu0 %v443
    %v584 = vpop.f32.mrb[0].mxu0
    %v585 = vadd.f32 %v468, %v584
    %v586 = vpop.f32.mrb[0].mxu0
    %v587 = vpop.f32.mrb[0].mxu0
    %v588 = vadd.f32 %v468, %v587
    %v589 = vpop.f32.mrb[0].mxu0
    %590 = vmatprep.mubr.bf16.mxu0 0
    %591 = vmatmul.mubr.bf16.gmra.mrb[0].mxu0 %v444
    %v592 = vpop.f32.mrb[0].mxu0
    %v593 = vadd.f32 %v468, %v592
    %v594 = vpop.f32.mrb[0].mxu0
    %v595 = vpop.f32.mrb[0].mxu0
    %v596 = vadd.f32 %v468, %v595
    %v597 = vpop.f32.mrb[0].mxu0
    %598 = vmatprep.mubr.bf16.mxu0 0
    %599 = vmatmul.mubr.bf16.gmra.mrb[0].mxu0 %v445
    %v600 = vpop.f32.mrb[0].mxu0
    %v601 = vadd.f32 %v468, %v600
    %v602 = vpop.f32.mrb[0].mxu0
    %v603 = vpop.f32.mrb[0].mxu0
    %v604 = vadd.f32 %v468, %v603
    %v605 = vpop.f32.mrb[0].mxu0
    %606 = vmatprep.mubr.bf16.mxu0 0
    %607 = vmatmul.mubr.bf16.gmra.mrb[0].mxu0 %v446
    %v608 = vpop.f32.mrb[0].mxu0
    %v609 = vadd.f32 %v468, %v608
    %v610 = vpop.f32.mrb[0].mxu0
    %v611 = vpop.f32.mrb[0].mxu0
    %v612 = vadd.f32 %v468, %v611
    %v613 = vpop.f32.mrb[0].mxu0
    %614 = vdwg.mxu0
    %v615 = vmax.f32 %v553, 0.0
    %v616 = vmax.f32 %v556, 0.0
    %v617 = vmax.f32 %v561, 0.0
    %v618 = vmax.f32 %v564, 0.0
    %v619 = vmax.f32 %v569, 0.0
    %v620 = vmax.f32 %v572, 0.0
    %v621 = vmax.f32 %v577, 0.0
    %v622 = vmax.f32 %v580, 0.0
    %v623 = vmax.f32 %v585, 0.0
    %v624 = vmax.f32 %v588, 0.0
    %v625 = vmax.f32 %v593, 0.0
    %v626 = vmax.f32 %v596, 0.0
    %v627 = vmax.f32 %v601, 0.0
    %v628 = vmax.f32 %v604, 0.0
    %v629 = vmax.f32 %v609, 0.0
    %v630 = vmax.f32 %v612, 0.0
    %v631 = vpack.c.bf16 %v616, %v615
    %v632 = vpack.c.bf16 %v618, %v617
    %v633 = vpack.c.bf16 %v620, %v619
    %v634 = vpack.c.bf16 %v622, %v621
    %v635 = vpack.c.bf16 %v624, %v623
    %v636 = vpack.c.bf16 %v626, %v625
    %v637 = vpack.c.bf16 %v628, %v627
    %v638 = vpack.c.bf16 %v630, %v629
    %v639 = vld [vmem:[%s5] sm:$0xf]
    %v640 = vld [vmem:[%s5 + $0x4] sm:$0xf]
    %v643 = vunpack.c.l.b16 %v639
    %v644 = vunpack.c.l.b16 %v640
    %v645 = vpack.c.b16 %v644, %v643
    %647 = vmatprep.subr.bf16.mxu0 0
    %648 = vmatpush1.bf16.msra.mxu0 %v631
    %649 = vmatprep.subr.bf16.mxu0 0
    %650 = vmatpush1.bf16.msra.mxu0 %v632
    %651 = vmatprep.subr.bf16.mxu0 0
    %652 = vmatpush1.bf16.msra.mxu0 %v633
    %653 = vmatprep.subr.bf16.mxu0 0
    %654 = vmatpush1.bf16.msra.mxu0 %v634
    %655 = vmatprep.subr.bf16.mxu0 0
    %656 = vmatpush1.bf16.msra.mxu0 %v635
    %657 = vmatprep.subr.bf16.mxu0 0
    %658 = vmatpush1.bf16.msra.mxu0 %v636
    %659 = vmatprep.subr.bf16.mxu0 0
    %660 = vmatpush1.bf16.msra.mxu0 %v637
    %661 = vmatprep.subr.bf16.mxu0 0
    %662 = vmatpush1.bf16.msra.mxu0 %v638
    %663 = vmatprep.subr.bf16.mxu0 0
    %664 = vmatpush1.bf16.msra.mxu0 0
    %665 = vmatprep.subr.bf16.mxu0 0
    %666 = vmatpush1.bf16.msra.mxu0 0
    %667 = vmatprep.subr.bf16.mxu0 0
    %668 = vmatpush1.bf16.msra.mxu0 0
    %669 = vmatprep.subr.bf16.mxu0 0
    %670 = vmatpush1.bf16.msra.mxu0 0
    %671 = vmatprep.subr.bf16.mxu0 0
    %672 = vmatpush1.bf16.msra.mxu0 0
    %673 = vmatprep.subr.bf16.mxu0 0
    %674 = vmatpush1.bf16.msra.mxu0 0
    %675 = vmatprep.subr.bf16.mxu0 0
    %676 = vmatpush1.bf16.msra.mxu0 0
    %677 = vmatprep.subr.bf16.mxu0 0
    %678 = vmatpush1.bf16.msra.mxu0 0
    %679 = vmatprep.mubr.bf16.mxu0 0
    %680 = vmatmul.mubr.bf16.gmra.mrb[0].mxu0 %v645
    %v681 = vpop.f32.mrb[0].mxu0
    %v682 = vadd.f32 0.0, %v681
    %v683 = vpop.f32.mrb[0].mxu0
    %v684 = vpop.f32.mrb[0].mxu0
    %v685 = vadd.f32 0.0, %v684
    %v686 = vpop.f32.mrb[0].mxu0
    %687 = vdwg.mxu0
    %v688 = vpack.c.bf16 %v685, %v682
    %v689 = vld [vmem:[#allocation8] sm:$0xf]
    %v690 = vld [vmem:[#allocation8 + $0x4] sm:$0xf]
    %v691 = vld [vmem:[#allocation8 + $0x8] sm:$0xf]
    %v692 = vld [vmem:[#allocation8 + $0xc] sm:$0xf]
    %v693 = vld [vmem:[#allocation8 + $0x10] sm:$0xf]
    %v694 = vld [vmem:[#allocation8 + $0x14] sm:$0xf]
    %v695 = vld [vmem:[#allocation8 + $0x18] sm:$0xf]
    %v696 = vld [vmem:[#allocation8 + $0x1c] sm:$0xf]
    %v697 = vld [vmem:[#allocation8 + $0x20] sm:$0xf]
    %v698 = vld [vmem:[#allocation8 + $0x24] sm:$0xf]
    %v699 = vld [vmem:[#allocation8 + $0x28] sm:$0xf]
    %v700 = vld [vmem:[#allocation8 + $0x2c] sm:$0xf]
    %v701 = vld [vmem:[#allocation8 + $0x30] sm:$0xf]
    %v702 = vld [vmem:[#allocation8 + $0x34] sm:$0xf]
    %v703 = vld [vmem:[#allocation8 + $0x38] sm:$0xf]
    %v704 = vld [vmem:[#allocation8 + $0x3c] sm:$0xf]
    %v705 = vld [vmem:[%s7] sm:$0x1]
    %v707 = vlaneseq
    %v708 = vshrl.u32 %v707, 7
    %v709 = vsub.s32 0, %v708
    %v710 = vrot.slane %v705, %v709
    %v728 = vunpack.c.l.b16 %v689
    %v729 = vunpack.c.l.b16 %v690
    %v730 = vunpack.c.l.b16 %v691
    %v731 = vunpack.c.l.b16 %v692
    %v732 = vunpack.c.l.b16 %v693
    %v733 = vunpack.c.l.b16 %v694
    %v734 = vunpack.c.l.b16 %v695
    %v735 = vunpack.c.l.b16 %v696
    %v736 = vunpack.c.l.b16 %v697
    %v737 = vunpack.c.l.b16 %v698
    %v738 = vunpack.c.l.b16 %v699
    %v739 = vunpack.c.l.b16 %v700
    %v740 = vunpack.c.l.b16 %v701
    %v741 = vunpack.c.l.b16 %v702
    %v742 = vunpack.c.l.b16 %v703
    %v743 = vunpack.c.l.b16 %v704
    %v744 = vpack.c.b16 %v729, %v728
    %v745 = vpack.c.b16 %v731, %v730
    %v746 = vpack.c.b16 %v733, %v732
    %v747 = vpack.c.b16 %v735, %v734
    %v748 = vpack.c.b16 %v737, %v736
    %v749 = vpack.c.b16 %v739, %v738
    %v750 = vpack.c.b16 %v741, %v740
    %v751 = vpack.c.b16 %v743, %v742
    %760 = vmatprep.subr.bf16.mxu0 0
    %761 = vmatpush1.bf16.msra.mxu0 %v744
    %762 = vmatprep.subr.bf16.mxu0 0
    %763 = vmatpush1.bf16.msra.mxu0 %v745
    %764 = vmatprep.subr.bf16.mxu0 0
    %765 = vmatpush1.bf16.msra.mxu0 %v746
    %766 = vmatprep.subr.bf16.mxu0 0
    %767 = vmatpush1.bf16.msra.mxu0 %v747
    %768 = vmatprep.subr.bf16.mxu0 0
    %769 = vmatpush1.bf16.msra.mxu0 %v748
    %770 = vmatprep.subr.bf16.mxu0 0
    %771 = vmatpush1.bf16.msra.mxu0 %v749
    %772 = vmatprep.subr.bf16.mxu0 0
    %773 = vmatpush1.bf16.msra.mxu0 %v750
    %774 = vmatprep.subr.bf16.mxu0 0
    %775 = vmatpush1.bf16.msra.mxu0 %v751
    %776 = vmatprep.subr.bf16.mxu0 0
    %777 = vmatpush1.bf16.msra.mxu0 0
    %778 = vmatprep.subr.bf16.mxu0 0
    %779 = vmatpush1.bf16.msra.mxu0 0
    %780 = vmatprep.subr.bf16.mxu0 0
    %781 = vmatpush1.bf16.msra.mxu0 0
    %782 = vmatprep.subr.bf16.mxu0 0
    %783 = vmatpush1.bf16.msra.mxu0 0
    %784 = vmatprep.subr.bf16.mxu0 0
    %785 = vmatpush1.bf16.msra.mxu0 0
    %786 = vmatprep.subr.bf16.mxu0 0
    %787 = vmatpush1.bf16.msra.mxu0 0
    %788 = vmatprep.subr.bf16.mxu0 0
    %789 = vmatpush1.bf16.msra.mxu0 0
    %790 = vmatprep.subr.bf16.mxu0 0
    %791 = vmatpush1.bf16.msra.mxu0 0
    %792 = vmatprep.mubr.bf16.mxu0 0
    %793 = vmatmul.mubr.bf16.gmra.mrb[0].mxu0 %v688
    %v794 = vpop.f32.mrb[0].mxu0
    %v795 = vadd.f32 %v710, %v794
    %v796 = vpop.f32.mrb[0].mxu0
    %v797 = vpop.f32.mrb[0].mxu0
    %v798 = vadd.f32 %v710, %v797
    %v799 = vpop.f32.mrb[0].mxu0
    %800 = vdwg.mxu0
    %v801 = vlaneseq
    %v802 = vand.u32 %v801, 127
    %vm803 = vcmp.eq.s32.totalorder %v802, 0
    %vm804 = vcmp.ge.s32.totalorder %v802, 1
    %vm805 = vcmp.le.s32.totalorder %v802, 16
    %vm806 = vmand %vm804, %vm805
    %v807 = vsel %vm806, %v795, -1e+30
    %v808 = vsel %vm806, %v798, -1e+30
    %809 = vmax.xlane.f32.xlu0 %v807
    %v810 = vpop.xlane.xlu0 %809
    %811 = vmax.xlane.f32.xlu0 %v808
    %v812 = vpop.xlane.xlu0 %811
    %v813 = vsub.f32 %v807, %v810
    %v814 = vsub.f32 %v808, %v812
    %v815 = vmul.f32 %v813, 1.442695
    %v816 = vpow.pop %v815
    %v817 = vmul.f32 %v814, 1.442695
    %v818 = vpow.pop %v817
    %v819 = vsel %vm806, %v816, 0.0
    %v820 = vsel %vm806, %v818, 0.0
    %821 = vadd.xlane.f32.xlu0 %v819
    %v822 = vpop.xlane.xlu0 %821
    %823 = vadd.xlane.f32.xlu0 %v820
    %v824 = vpop.xlane.xlu0 %823
    %v825 = vrcp.pop %v822
    %v826 = vmul.f32 %v819, %v825
    %v827 = vrcp.pop %v824
    %v828 = vmul.f32 %v820, %v827
    %v829 = vtanh.pop %v795
    %v830 = vtanh.pop %v798
    %v831 = vsel %vm803, %v829, %v826
    %v832 = vsel %vm803, %v830, %v828
    %833 = vst [vmem:[#allocation10] sm:$0xff] %v831
    %834 = vst [vmem:[#allocation10 + $0x8] sm:$0xff] %v832
    // Predicated region
    $region50: #{tpu_custom_call.1} parent=1 // pred_check
      _
    $region51: #{tpu_custom_call.1} parent=1 // pred_check_branch
      %836 = sbr.rel (0) target = $region53
    $region52: #{tpu_custom_call.1} parent=1 // pred_region
      %s838 = ssub.s32 256, 256
      %839 = vsyncadd [#allocation4], %s838
      %s840 = sshll.u32 [#allocation10], 4
      %s841 = int_to_ptr.vmem [resolvable:$true] %s840
      %846 = dma.vmem_to_hbm [thread:$0]  %s841, 256, %s8, [#allocation4], 128, 128, 8
    $region53: #{tpu_custom_call.1} parent=1 // pred_fallthru
      _
    // Predicated region
    $region54: #{tpu_custom_call.1} parent=1 // pred_check
      _
    $region55: #{tpu_custom_call.1} parent=1 // pred_check_branch
      %848 = sbr.rel (0) target = $region57
    $region56: #{tpu_custom_call.1} parent=1 // pred_region
      %849 = dma.done [#allocation4], 256
    $region57: #{tpu_custom_call.1} parent=1 // pred_fallthru
      _
    %850 = vsyncpa [#allocation3], 1
    %851 = vsyncpa [#allocation6], 1
    %852 = vsyncpa [#allocation9], 1
    %853 = vsyncpa [#allocation4], 1

</llo_original>
